<compile_context>
chip_gen: v7x
topology: tpu7x:2x2x1
jax: 0.10.0
libtpu: 0.0.40
codegen_flags: <defaults>
</compile_context>

<pallas_src>
import functools

import jax
import jax.numpy as jnp
from jax.experimental import pallas as pl
from jax.experimental.pallas import tpu as pltpu


_LANES = 128                       # lane width of the split-softmax accumulators
_PAD_LABEL_A = -2147483648         # sentinel for padded anchor rows   (INT32_MIN)
_PAD_LABEL_C = -2147483647         # sentinel for padded contrast cols (INT32_MIN+1)


def _round_up(x, m):
    return ((x + m - 1) // m) * m


def _supcon_kernel(anchor_ref, contrast_ref, la_ref, lc_ref, out_ref,
                   m_ref, l_ref, s_ref, c_ref, *,
                   inv_temp, scale, a_real, n_real, n_pad, tile_a, tile_n):
    i = pl.program_id(0)           # anchor-tile index   (parallel)
    j = pl.program_id(1)           # contrast-tile index (reduction, last axis)
    n_chunks = tile_n // _LANES

    @pl.when(j == 0)
    def _init():
        m_ref[...] = jnp.full_like(m_ref, -jnp.inf)
        l_ref[...] = jnp.zeros_like(l_ref)
        s_ref[...] = jnp.zeros_like(s_ref)
        c_ref[...] = jnp.zeros_like(c_ref)

    # anchor_dot_contrast tile; contract over D directly (K-last contraction as in
    # the reference flash-attention kernels: MXU-native, no materialized transpose,
    # and the [TILE_N, D] contrast block stays a contiguous HBM chunk for the DMA).
    adc = jax.lax.dot_general(
        anchor_ref[...], contrast_ref[...],
        dimension_numbers=(((1,), (1,)), ((), ())),
        preferred_element_type=jnp.float32) * inv_temp          # [tile_a, tile_n] f32

    # ---- per-lane (split-softmax) running-max update: pure VPU, no XLU ----
    # Max over 128-lane chunks; padded columns contribute adc==0 to the max, which
    # cancels exactly in mean_log_prob_pos = S/C - m - log(l).
    tile_max = adc[:, 0:_LANES]
    for k in range(1, n_chunks):
        tile_max = jnp.maximum(tile_max, adc[:, k * _LANES:(k + 1) * _LANES])
    m_prev = m_ref[...]
    m_new = jnp.maximum(m_prev, tile_max)
    m_ref[...] = m_new
    # Rescale the per-lane running denominator: one (tile_a, 128) exp per tile.
    l_ref[...] = l_ref[...] * jnp.exp(m_prev - m_new)

    la = jnp.broadcast_to(la_ref[...], (tile_a, _LANES))        # hoisted broadcast

    def accumulate(masked):
        l_acc = l_ref[...]
        s_acc = s_ref[...]
        c_acc = c_ref[...]
        if masked:
            row = i * tile_a + jax.lax.broadcasted_iota(
                jnp.int32, (tile_a, _LANES), 0)
            lane = jax.lax.broadcasted_iota(jnp.int32, (tile_a, _LANES), 1)
        for k in range(n_chunks):
            chunk = adc[:, k * _LANES:(k + 1) * _LANES]          # (tile_a, 128)
            pmask = la == lc_ref[:, k * _LANES:(k + 1) * _LANES]
            if masked:
                col = j * tile_n + k * _LANES + lane
                lmask = jnp.logical_and(row != col, col < n_real)
                pmask = jnp.logical_and(pmask, lmask)
                e = jnp.where(lmask, jnp.exp(chunk - m_new), 0.0)
            else:
                e = jnp.exp(chunk - m_new)
            l_acc = l_acc + e
            s_acc = s_acc + jnp.where(pmask, chunk, 0.0)
            c_acc = c_acc + pmask.astype(jnp.float32)
        l_ref[...] = l_acc
        s_ref[...] = s_acc
        c_ref[...] = c_acc

    # Gate the mask work: only tiles straddling the diagonal need self-exclusion,
    # and (when N is padded) only the last contrast tile needs column validity.
    need_mask = jnp.logical_and(i * tile_a < (j + 1) * tile_n,
                                j * tile_n < (i + 1) * tile_a)
    if n_pad > n_real:
        need_mask = jnp.logical_or(need_mask, j == pl.num_programs(1) - 1)

    @pl.when(need_mask)
    def _masked_path():
        accumulate(True)

    @pl.when(jnp.logical_not(need_mask))
    def _fast_path():
        accumulate(False)

    @pl.when(j == pl.num_programs(1) - 1)
    def _finalize():
        # Single cross-lane (XLU) combine per anchor tile.
        m_lane = m_ref[...]
        m_row = jnp.max(m_lane, axis=1, keepdims=True)
        l_row = jnp.sum(l_ref[...] * jnp.exp(m_lane - m_row), axis=1, keepdims=True)
        s_row = jnp.sum(s_ref[...], axis=1, keepdims=True)
        c_row = jnp.sum(c_ref[...], axis=1, keepdims=True)
        # mean log-prob over positives = S/C - m - log(l)
        mean_lp = s_row / jnp.maximum(c_row, 1.0) - m_row - jnp.log(l_row)
        row1 = i * tile_a + jax.lax.broadcasted_iota(jnp.int32, (tile_a, 1), 0)
        # Guard: padded rows and rows with zero positives contribute 0
        # (the PyTorch reference would produce NaN via 0/0 for the latter).
        valid = jnp.logical_and(row1 < a_real, c_row > 0.0)
        out_ref[...] = jnp.where(valid, -scale * mean_lp, 0.0)


def _supcon_loss_ref(features, labels=None, mask=None, *, temperature=0.07,
                     base_temperature=0.07, contrast_mode='all'):
    """Pure-JAX reference mirroring the PyTorch module (verification / mask fallback)."""
    bsz, n_views = features.shape[0], features.shape[1]
    features = features.reshape(bsz, n_views, -1).astype(jnp.float32)
    if labels is None and mask is None:
        base_mask = jnp.eye(bsz, dtype=jnp.float32)
    elif labels is not None:
        labels = labels.reshape(-1, 1)
        base_mask = (labels == labels.T).astype(jnp.float32)
    else:
        base_mask = mask.astype(jnp.float32)
    contrast_feature = jnp.transpose(features, (1, 0, 2)).reshape(n_views * bsz, -1)
    if contrast_mode == 'one':
        anchor_feature = features[:, 0]
        anchor_count = 1
    else:
        anchor_feature = contrast_feature
        anchor_count = n_views
    adc = (anchor_feature @ contrast_feature.T) / temperature
    logits = adc - jnp.max(adc, axis=1, keepdims=True)
    full_mask = jnp.tile(base_mask, (anchor_count, n_views))
    A, N = anchor_count * bsz, n_views * bsz
    logits_mask = 1.0 - (jnp.arange(A)[:, None] == jnp.arange(N)[None, :]).astype(jnp.float32)
    full_mask = full_mask * logits_mask
    exp_logits = jnp.exp(logits) * logits_mask
    log_prob = logits - jnp.log(exp_logits.sum(1, keepdims=True))
    mean_log_prob_pos = (full_mask * log_prob).sum(1) / full_mask.sum(1)
    loss = -(temperature / base_temperature) * mean_log_prob_pos
    return loss.mean()


def supcon_loss(features, labels=None, mask=None, *, temperature=0.07,
                base_temperature=0.07, contrast_mode='all',
                tile_a=256, tile_n=512,
                compute_dtype=jnp.bfloat16,
                contrast_buffers=None,
                vmem_limit_bytes=48 * 1024 * 1024):
    """JAX/Pallas port of SupConLoss.forward. Returns a scalar float32 loss."""
    if features.ndim < 3:
        raise ValueError('`features` needs to be [bsz, n_views, ...]')
    if features.ndim > 3:
        features = features.reshape(features.shape[0], features.shape[1], -1)
    bsz, n_views, dim = features.shape

    if labels is not None and mask is not None:
        raise ValueError('Cannot define both `labels` and `mask`')
    if mask is not None:
        # TODO(synk): an arbitrary (possibly asymmetric) [bsz, bsz] mask has no label
        # structure to regenerate per-tile in-kernel; fall back to pure JAX.
        return _supcon_loss_ref(features, mask=mask, temperature=temperature,
                                base_temperature=base_temperature,
                                contrast_mode=contrast_mode)
    if labels is None:
        labels = jnp.arange(bsz, dtype=jnp.int32)            # SimCLR: eye mask
    else:
        labels = jnp.asarray(labels).reshape(-1).astype(jnp.int32)
        if labels.shape[0] != bsz:
            raise ValueError('Num of labels does not match num of features')

    # bf16 compute by default: ~3x MXU throughput and half the contrast DMA bytes;
    # accumulation stays f32 inside the kernel (preferred_element_type).
    feat_dtype = jnp.dtype(compute_dtype) if compute_dtype is not None else features.dtype
    features = features.astype(feat_dtype)
    row_align = 8 if jnp.dtype(feat_dtype).itemsize >= 4 else 16

    # contrast_feature = cat(unbind(features, dim=1), dim=0)   (view-major order)
    contrast_feature = jnp.transpose(features, (1, 0, 2)).reshape(n_views * bsz, dim)
    contrast_labels = jnp.tile(labels, n_views)

    if contrast_mode == 'one':
        anchor_feature = features[:, 0]
        anchor_labels = labels
        anchor_count = 1
    elif contrast_mode == 'all':
        anchor_feature = contrast_feature
        anchor_labels = contrast_labels
        anchor_count = n_views
    else:
        raise ValueError(f'Unknown mode: {contrast_mode}')

    A = anchor_count * bsz
    N = n_views * bsz

    # --- tile selection ---
    if A <= tile_a:
        if A >= 256:
            # Split into two anchor tiles so the "parallel" axis can occupy both
            # TensorCores on v7x; each tile stays >= 128 rows (MXU efficient).
            TILE_A = _round_up((A + 1) // 2, row_align)
            A_pad = 2 * TILE_A
        else:
            TILE_A = _round_up(A, row_align)
            A_pad = TILE_A
    else:
        if tile_a % row_align:
            raise ValueError(f'tile_a must be a multiple of {row_align}')
        TILE_A = tile_a
        A_pad = _round_up(A, TILE_A)

    if N <= tile_n:
        TILE_N = _round_up(N, _LANES)     # keep 128-lane chunks for the accumulators
        N_pad = TILE_N
    else:
        if tile_n % _LANES:
            raise ValueError('tile_n must be a multiple of 128 when N > tile_n')
        TILE_N = tile_n
        N_pad = _round_up(N, TILE_N)

    # Zero-pad features; sentinel pad labels never match each other, and padded
    # rows/cols are additionally excluded in-kernel (row<A at finalize, col<N on the
    # masked path which is always taken for the padded last contrast tile).
    anchor_p = jnp.pad(anchor_feature, ((0, A_pad - A), (0, 0)))
    contrast_p = jnp.pad(contrast_feature, ((0, N_pad - N), (0, 0)))
    la_p = jnp.pad(anchor_labels, (0, A_pad - A),
                   constant_values=_PAD_LABEL_A).reshape(A_pad, 1)
    lc_p = jnp.pad(contrast_labels, (0, N_pad - N),
                   constant_values=_PAD_LABEL_C).reshape(1, N_pad)

    grid = (A_pad // TILE_A, N_pad // TILE_N)

    contrast_spec = pl.BlockSpec((TILE_N, dim), lambda i, j: (j, 0))
    if contrast_buffers is not None:
        # Deeper buffering of the contrast stream if profiling shows exposed DMA.
        contrast_spec = pl.BlockSpec((TILE_N, dim), lambda i, j: (j, 0),
                                     pipeline_mode=pl.Buffered(contrast_buffers))

    kernel = functools.partial(
        _supcon_kernel,
        inv_temp=1.0 / float(temperature),
        scale=float(temperature) / float(base_temperature),
        a_real=A, n_real=N, n_pad=N_pad, tile_a=TILE_A, tile_n=TILE_N)

    per_row = pl.pallas_call(
        kernel,
        out_shape=jax.ShapeDtypeStruct((A_pad, 1), jnp.float32),
        grid_spec=pltpu.PrefetchScalarGridSpec(
            num_scalar_prefetch=0,
            grid=grid,
            in_specs=[
                pl.BlockSpec((TILE_A, dim), lambda i, j: (i, 0)),   # anchor tile
                contrast_spec,                                       # contrast tile
                pl.BlockSpec((TILE_A, 1), lambda i, j: (i, 0)),      # anchor labels
                pl.BlockSpec((1, TILE_N), lambda i, j: (0, j)),      # contrast labels
            ],
            # Output written once per anchor tile (last j step only), so the narrow
            # (TILE_A, 1) store is negligible; a lane-dense (1, TILE_A) layout would
            # need an in-kernel sublane->lane relayout for no measurable gain.
            out_specs=pl.BlockSpec((TILE_A, 1), lambda i, j: (i, 0)),
            scratch_shapes=[pltpu.VMEM((TILE_A, _LANES), jnp.float32)] * 4,  # m,l,S,C
        ),
        compiler_params=pltpu.CompilerParams(
            dimension_semantics=("parallel", "arbitrary"),
            vmem_limit_bytes=vmem_limit_bytes),
    )(anchor_p, contrast_p, la_p, lc_p)

    # TODO(synk): contrast_mode='all' adc symmetry (compute each off-diagonal tile
    # once) is not exploited; only worthwhile when MXU-bound at large D.
    # loss.view(anchor_count, batch_size).mean() == mean over all A anchors.
    return jnp.sum(per_row[:, 0]) / A


if __name__ == "__main__":
    key = jax.random.PRNGKey(0)
    k1, k2, k3, k4 = jax.random.split(key, 4)

    # --- test 1: tiny single-tile grid, exact f32 path ---
    bsz, n_views, dim = 4, 2, 32
    feats = jax.random.normal(k1, (bsz, n_views, dim), dtype=jnp.float32)
    feats = feats / jnp.linalg.norm(feats, axis=-1, keepdims=True)
    labels = jnp.array([0, 1, 0, 1], dtype=jnp.int32)
    loss = jax.block_until_ready(
        supcon_loss(feats, labels=labels, compute_dtype=jnp.float32))
    ref = _supcon_loss_ref(feats, labels=labels)
    assert jnp.allclose(loss, ref, rtol=1e-4, atol=1e-5), (loss, ref)

    # --- test 2: multi-tile 2x2 grid, f32; exercises the online reduction, the
    #     masked (diagonal / padded-column) path and the unmasked fast path ---
    bsz2, n_views2, dim2 = 72, 2, 64
    feats2 = jax.random.normal(k2, (bsz2, n_views2, dim2), dtype=jnp.float32)
    feats2 = feats2 / jnp.linalg.norm(feats2, axis=-1, keepdims=True)
    labels2 = jax.random.randint(k3, (bsz2,), 0, 6, dtype=jnp.int32)
    loss2 = jax.block_until_ready(
        supcon_loss(feats2, labels=labels2, tile_a=128, tile_n=128,
                    compute_dtype=jnp.float32))
    ref2 = _supcon_loss_ref(feats2, labels=labels2)
    assert jnp.allclose(loss2, ref2, rtol=1e-4, atol=1e-4), (loss2, ref2)

    # --- test 3: default bf16 compute path (MXU-native inputs, f32 accumulation) ---
    loss3 = jax.block_until_ready(
        supcon_loss(feats2, labels=labels2, tile_a=128, tile_n=128))
    ref3 = _supcon_loss_ref(feats2.astype(jnp.bfloat16).astype(jnp.float32),
                            labels=labels2)
    assert jnp.allclose(loss3, ref3, rtol=5e-3, atol=5e-3), (loss3, ref3)

    # --- test 4: SimCLR path (labels=None -> eye mask) ---
    loss4 = jax.block_until_ready(supcon_loss(feats, compute_dtype=jnp.float32))
    ref4 = _supcon_loss_ref(feats)
    assert jnp.allclose(loss4, ref4, rtol=1e-4, atol=1e-5), (loss4, ref4)

    # --- test 5: contrast_mode='one' ---
    loss5 = jax.block_until_ready(
        supcon_loss(feats2, labels=labels2, contrast_mode='one',
                    tile_a=128, tile_n=128, compute_dtype=jnp.float32))
    ref5 = _supcon_loss_ref(feats2, labels=labels2, contrast_mode='one')
    assert jnp.allclose(loss5, ref5, rtol=1e-4, atol=2e-4), (loss5, ref5)

    # --- test 6: small-A megacore split (A==256 -> two anchor tiles), 2-chunk lanes ---
    bsz6, dim6 = 128, 48
    feats6 = jax.random.normal(k4, (bsz6, 2, dim6), dtype=jnp.float32)
    feats6 = feats6 / jnp.linalg.norm(feats6, axis=-1, keepdims=True)
    labels6 = jnp.arange(bsz6, dtype=jnp.int32) % 10
    loss6 = jax.block_until_ready(
        supcon_loss(feats6, labels=labels6, compute_dtype=jnp.float32))
    ref6 = _supcon_loss_ref(feats6, labels=labels6)
    assert jnp.allclose(loss6, ref6, rtol=1e-4, atol=2e-4), (loss6, ref6)

    print("KERNEL_OK")
</pallas_src>

<mosaic_0001>
module attributes {stable_mosaic.version = 11 : i64} {
  func.func @_supcon_kernel(%arg0: i32, %arg1: i32, %arg2: memref<8x32xf32, #tpu.memory_space<vmem>>, %arg3: memref<128x32xf32, #tpu.memory_space<vmem>>, %arg4: memref<8x1xi32, #tpu.memory_space<vmem>>, %arg5: memref<1x128xi32, #tpu.memory_space<vmem>>, %arg6: memref<8x1xf32, #tpu.memory_space<vmem>>, %arg7: memref<8x128xf32, #tpu.memory_space<vmem>>, %arg8: memref<8x128xf32, #tpu.memory_space<vmem>>, %arg9: memref<8x128xf32, #tpu.memory_space<vmem>>, %arg10: memref<8x128xf32, #tpu.memory_space<vmem>>) attributes {dimension_semantics = [#tpu.dimension_semantics<parallel>, #tpu.dimension_semantics<arbitrary>], iteration_bounds = array<i64: 1, 1>, scalar_prefetch = 0 : i64, scratch_operands = 4 : i64, tpu.core_type = #tpu.core_type<tc>, window_params = [{transform_indices = @transform_0, window_bounds = array<i64: 8, 32>}, {transform_indices = @transform_1, window_bounds = array<i64: 128, 32>}, {transform_indices = @transform_2, window_bounds = array<i64: 8, 1>}, {transform_indices = @transform_3, window_bounds = array<i64: 1, 128>}, {transform_indices = @transform_4, window_bounds = array<i64: 8, 1>}]} {
    %c0_i32 = arith.constant 0 : i32
    %0 = arith.cmpi eq, %arg1, %c0_i32 : i32
    %1 = arith.extui %0 : i1 to i32
    %c0_i32_0 = arith.constant 0 : i32
    %2 = arith.cmpi ne, %1, %c0_i32_0 : i32
    scf.if %2 {
      %cst_23 = arith.constant 0xFF800000 : f32
      %38 = vector.broadcast %cst_23 : f32 to vector<8x128xf32>
      %c0_24 = arith.constant 0 : index
      %c0_25 = arith.constant 0 : index
      %39 = vector.load %arg7[%c0_24, %c0_25] : memref<8x128xf32, #tpu.memory_space<vmem>>, vector<8x128xf32>
      tpu.vector_store %arg7[%c0_24, %c0_25], %38 {strides = array<i32>} : memref<8x128xf32, #tpu.memory_space<vmem>>, vector<8x128xf32>,
      %cst_26 = arith.constant 0.000000e+00 : f32
      %40 = vector.broadcast %cst_26 : f32 to vector<8x128xf32>
      %c0_27 = arith.constant 0 : index
      %c0_28 = arith.constant 0 : index
      %41 = vector.load %arg8[%c0_27, %c0_28] : memref<8x128xf32, #tpu.memory_space<vmem>>, vector<8x128xf32>
      tpu.vector_store %arg8[%c0_27, %c0_28], %40 {strides = array<i32>} : memref<8x128xf32, #tpu.memory_space<vmem>>, vector<8x128xf32>,
      %cst_29 = arith.constant 0.000000e+00 : f32
      %42 = vector.broadcast %cst_29 : f32 to vector<8x128xf32>
      %c0_30 = arith.constant 0 : index
      %c0_31 = arith.constant 0 : index
      %43 = vector.load %arg9[%c0_30, %c0_31] : memref<8x128xf32, #tpu.memory_space<vmem>>, vector<8x128xf32>
      tpu.vector_store %arg9[%c0_30, %c0_31], %42 {strides = array<i32>} : memref<8x128xf32, #tpu.memory_space<vmem>>, vector<8x128xf32>,
      %cst_32 = arith.constant 0.000000e+00 : f32
      %44 = vector.broadcast %cst_32 : f32 to vector<8x128xf32>
      %c0_33 = arith.constant 0 : index
      %c0_34 = arith.constant 0 : index
      %45 = vector.load %arg10[%c0_33, %c0_34] : memref<8x128xf32, #tpu.memory_space<vmem>>, vector<8x128xf32>
      tpu.vector_store %arg10[%c0_33, %c0_34], %44 {strides = array<i32>} : memref<8x128xf32, #tpu.memory_space<vmem>>, vector<8x128xf32>,
    } else {
    }
    %c0 = arith.constant 0 : index
    %c0_1 = arith.constant 0 : index
    %3 = vector.load %arg2[%c0, %c0_1] : memref<8x32xf32, #tpu.memory_space<vmem>>, vector<8x32xf32>
    %c0_2 = arith.constant 0 : index
    %c0_3 = arith.constant 0 : index
    %4 = vector.load %arg3[%c0_2, %c0_3] : memref<128x32xf32, #tpu.memory_space<vmem>>, vector<128x32xf32>
    %cst = arith.constant dense<0.000000e+00> : vector<8x128xf32>
    %5 = tpu.matmul %3, %4, %cst {dimension_numbers = #tpu.dot_dimension_numbers<[1], [1], [0], [0], [0, 0, 1, 0], [], []>} : vector<8x32xf32>, vector<128x32xf32>, vector<8x128xf32> -> vector<8x128xf32>
    %cst_4 = arith.constant 14.2857141 : f32
    %6 = vector.broadcast %cst_4 : f32 to vector<8x128xf32>
    %7 = arith.mulf %5, %6 : vector<8x128xf32>
    %c0_5 = arith.constant 0 : index
    %c0_6 = arith.constant 0 : index
    %8 = vector.load %arg7[%c0_5, %c0_6] : memref<8x128xf32, #tpu.memory_space<vmem>>, vector<8x128xf32>
    %9 = arith.maximumf %8, %7 : vector<8x128xf32>
    %c0_7 = arith.constant 0 : index
    %c0_8 = arith.constant 0 : index
    %10 = vector.load %arg7[%c0_7, %c0_8] : memref<8x128xf32, #tpu.memory_space<vmem>>, vector<8x128xf32>
    tpu.vector_store %arg7[%c0_7, %c0_8], %9 {strides = array<i32>} : memref<8x128xf32, #tpu.memory_space<vmem>>, vector<8x128xf32>,
    %c0_9 = arith.constant 0 : index
    %c0_10 = arith.constant 0 : index
    %11 = vector.load %arg8[%c0_9, %c0_10] : memref<8x128xf32, #tpu.memory_space<vmem>>, vector<8x128xf32>
    %12 = arith.subf %8, %9 : vector<8x128xf32>
    %13 = math.exp %12 : vector<8x128xf32>
    %14 = arith.mulf %11, %13 : vector<8x128xf32>
    %c0_11 = arith.constant 0 : index
    %c0_12 = arith.constant 0 : index
    %15 = vector.load %arg8[%c0_11, %c0_12] : memref<8x128xf32, #tpu.memory_space<vmem>>, vector<8x128xf32>
    tpu.vector_store %arg8[%c0_11, %c0_12], %14 {strides = array<i32>} : memref<8x128xf32, #tpu.memory_space<vmem>>, vector<8x128xf32>,
    %c0_13 = arith.constant 0 : index
    %c0_14 = arith.constant 0 : index
    %16 = vector.load %arg4[%c0_13, %c0_14] : memref<8x1xi32, #tpu.memory_space<vmem>>, vector<8x1xi32>
    %17 = vector.shape_cast %16 : vector<8x1xi32> to vector<8x1xi32>
    %18 = vector.broadcast %17 : vector<8x1xi32> to vector<8x128xi32>
    %c8_i32 = arith.constant 8 : i32
    %19 = arith.muli %arg0, %c8_i32 : i32
    %c1_i32 = arith.constant 1 : i32
    %20 = arith.addi %arg1, %c1_i32 : i32
    %c128_i32 = arith.constant 128 : i32
    %21 = arith.muli %20, %c128_i32 : i32
    %22 = arith.cmpi slt, %19, %21 : i32
    %c128_i32_15 = arith.constant 128 : i32
    %23 = arith.muli %arg1, %c128_i32_15 : i32
    %c1_i32_16 = arith.constant 1 : i32
    %24 = arith.addi %arg0, %c1_i32_16 : i32
    %c8_i32_17 = arith.constant 8 : i32
    %25 = arith.muli %24, %c8_i32_17 : i32
    %26 = arith.cmpi slt, %23, %25 : i32
    %27 = arith.andi %22, %26 : i1
    %c0_i32_18 = arith.constant 0 : i32
    %28 = arith.cmpi eq, %arg1, %c0_i32_18 : i32
    %29 = arith.ori %27, %28 : i1
    %30 = arith.extui %29 : i1 to i32
    %c0_i32_19 = arith.constant 0 : i32
    %31 = arith.cmpi ne, %30, %c0_i32_19 : i32
    scf.if %31 {
      %c0_23 = arith.constant 0 : index
      %c0_24 = arith.constant 0 : index
      %38 = vector.load %arg8[%c0_23, %c0_24] : memref<8x128xf32, #tpu.memory_space<vmem>>, vector<8x128xf32>
      %c0_25 = arith.constant 0 : index
      %c0_26 = arith.constant 0 : index
      %39 = vector.load %arg9[%c0_25, %c0_26] : memref<8x128xf32, #tpu.memory_space<vmem>>, vector<8x128xf32>
      %c0_27 = arith.constant 0 : index
      %c0_28 = arith.constant 0 : index
      %40 = vector.load %arg10[%c0_27, %c0_28] : memref<8x128xf32, #tpu.memory_space<vmem>>, vector<8x128xf32>
      %c8_i32_29 = arith.constant 8 : i32
      %41 = arith.muli %arg0, %c8_i32_29 : i32
      %42 = tpu.iota {dimensions = array<i32: 0>} : vector<8x128xi32>
      %43 = vector.broadcast %41 : i32 to vector<8x128xi32>
      %44 = arith.addi %43, %42 : vector<8x128xi32>
      %45 = tpu.iota {dimensions = array<i32: 1>} : vector<8x128xi32>
      %c0_30 = arith.constant 0 : index
      %c0_31 = arith.constant 0 : index
      %46 = vector.load %arg5[%c0_30, %c0_31] : memref<1x128xi32, #tpu.memory_space<vmem>>, vector<1x128xi32>
      %47 = vector.broadcast %46 : vector<1x128xi32> to vector<8x128xi32>
      %48 = arith.cmpi eq, %18, %47 : vector<8x128xi32>
      %c128_i32_32 = arith.constant 128 : i32
      %49 = arith.muli %arg1, %c128_i32_32 : i32
      %c0_i32_33 = arith.constant 0 : i32
      %50 = arith.addi %49, %c0_i32_33 : i32
      %51 = vector.broadcast %50 : i32 to vector<8x128xi32>
      %52 = arith.addi %51, %45 : vector<8x128xi32>
      %53 = arith.cmpi ne, %44, %52 : vector<8x128xi32>
      %c8_i32_34 = arith.constant 8 : i32
      %54 = vector.broadcast %c8_i32_34 : i32 to vector<8x128xi32>
      %55 = arith.cmpi slt, %52, %54 : vector<8x128xi32>
      %56 = arith.andi %53, %55 : vector<8x128xi1>
      %57 = arith.andi %48, %56 : vector<8x128xi1>
      %58 = arith.subf %7, %9 : vector<8x128xf32>
      %59 = math.exp %58 : vector<8x128xf32>
      %cst_35 = arith.constant 0.000000e+00 : f32
      %60 = vector.broadcast %cst_35 : f32 to vector<8x128xf32>
      %61 = arith.select %56, %59, %60 : vector<8x128xi1>, vector<8x128xf32>
      %62 = arith.addf %38, %61 : vector<8x128xf32>
      %cst_36 = arith.constant 0.000000e+00 : f32
      %63 = vector.broadcast %cst_36 : f32 to vector<8x128xf32>
      %64 = arith.select %57, %7, %63 : vector<8x128xi1>, vector<8x128xf32>
      %65 = arith.addf %39, %64 : vector<8x128xf32>
      %66 = arith.extui %57 : vector<8x128xi1> to vector<8x128xi32>
      %67 = arith.sitofp %66 : vector<8x128xi32> to vector<8x128xf32>
      %68 = arith.addf %40, %67 : vector<8x128xf32>
      %c0_37 = arith.constant 0 : index
      %c0_38 = arith.constant 0 : index
      %69 = vector.load %arg8[%c0_37, %c0_38] : memref<8x128xf32, #tpu.memory_space<vmem>>, vector<8x128xf32>
      tpu.vector_store %arg8[%c0_37, %c0_38], %62 {strides = array<i32>} : memref<8x128xf32, #tpu.memory_space<vmem>>, vector<8x128xf32>,
      %c0_39 = arith.constant 0 : index
      %c0_40 = arith.constant 0 : index
      %70 = vector.load %arg9[%c0_39, %c0_40] : memref<8x128xf32, #tpu.memory_space<vmem>>, vector<8x128xf32>
      tpu.vector_store %arg9[%c0_39, %c0_40], %65 {strides = array<i32>} : memref<8x128xf32, #tpu.memory_space<vmem>>, vector<8x128xf32>,
      %c0_41 = arith.constant 0 : index
      %c0_42 = arith.constant 0 : index
      %71 = vector.load %arg10[%c0_41, %c0_42] : memref<8x128xf32, #tpu.memory_space<vmem>>, vector<8x128xf32>
      tpu.vector_store %arg10[%c0_41, %c0_42], %68 {strides = array<i32>} : memref<8x128xf32, #tpu.memory_space<vmem>>, vector<8x128xf32>,
    } else {
    }
    %true = arith.constant true
    %32 = arith.xori %29, %true : i1
    %33 = arith.extui %32 : i1 to i32
    %c0_i32_20 = arith.constant 0 : i32
    %34 = arith.cmpi ne, %33, %c0_i32_20 : i32
    scf.if %34 {
      %c0_23 = arith.constant 0 : index
      %c0_24 = arith.constant 0 : index
      %38 = vector.load %arg8[%c0_23, %c0_24] : memref<8x128xf32, #tpu.memory_space<vmem>>, vector<8x128xf32>
      %c0_25 = arith.constant 0 : index
      %c0_26 = arith.constant 0 : index
      %39 = vector.load %arg9[%c0_25, %c0_26] : memref<8x128xf32, #tpu.memory_space<vmem>>, vector<8x128xf32>
      %c0_27 = arith.constant 0 : index
      %c0_28 = arith.constant 0 : index
      %40 = vector.load %arg10[%c0_27, %c0_28] : memref<8x128xf32, #tpu.memory_space<vmem>>, vector<8x128xf32>
      %c0_29 = arith.constant 0 : index
      %c0_30 = arith.constant 0 : index
      %41 = vector.load %arg5[%c0_29, %c0_30] : memref<1x128xi32, #tpu.memory_space<vmem>>, vector<1x128xi32>
      %42 = vector.broadcast %41 : vector<1x128xi32> to vector<8x128xi32>
      %43 = arith.cmpi eq, %18, %42 : vector<8x128xi32>
      %44 = arith.subf %7, %9 : vector<8x128xf32>
      %45 = math.exp %44 : vector<8x128xf32>
      %46 = arith.addf %38, %45 : vector<8x128xf32>
      %cst_31 = arith.constant 0.000000e+00 : f32
      %47 = vector.broadcast %cst_31 : f32 to vector<8x128xf32>
      %48 = arith.select %43, %7, %47 : vector<8x128xi1>, vector<8x128xf32>
      %49 = arith.addf %39, %48 : vector<8x128xf32>
      %50 = arith.extui %43 : vector<8x128xi1> to vector<8x128xi32>
      %51 = arith.sitofp %50 : vector<8x128xi32> to vector<8x128xf32>
      %52 = arith.addf %40, %51 : vector<8x128xf32>
      %c0_32 = arith.constant 0 : index
      %c0_33 = arith.constant 0 : index
      %53 = vector.load %arg8[%c0_32, %c0_33] : memref<8x128xf32, #tpu.memory_space<vmem>>, vector<8x128xf32>
      tpu.vector_store %arg8[%c0_32, %c0_33], %46 {strides = array<i32>} : memref<8x128xf32, #tpu.memory_space<vmem>>, vector<8x128xf32>,
      %c0_34 = arith.constant 0 : index
      %c0_35 = arith.constant 0 : index
      %54 = vector.load %arg9[%c0_34, %c0_35] : memref<8x128xf32, #tpu.memory_space<vmem>>, vector<8x128xf32>
      tpu.vector_store %arg9[%c0_34, %c0_35], %49 {strides = array<i32>} : memref<8x128xf32, #tpu.memory_space<vmem>>, vector<8x128xf32>,
      %c0_36 = arith.constant 0 : index
      %c0_37 = arith.constant 0 : index
      %55 = vector.load %arg10[%c0_36, %c0_37] : memref<8x128xf32, #tpu.memory_space<vmem>>, vector<8x128xf32>
      tpu.vector_store %arg10[%c0_36, %c0_37], %52 {strides = array<i32>} : memref<8x128xf32, #tpu.memory_space<vmem>>, vector<8x128xf32>,
    } else {
    }
    %c0_i32_21 = arith.constant 0 : i32
    %35 = arith.cmpi eq, %arg1, %c0_i32_21 : i32
    %36 = arith.extui %35 : i1 to i32
    %c0_i32_22 = arith.constant 0 : i32
    %37 = arith.cmpi ne, %36, %c0_i32_22 : i32
    scf.if %37 {
      %c0_23 = arith.constant 0 : index
      %c0_24 = arith.constant 0 : index
      %38 = vector.load %arg7[%c0_23, %c0_24] : memref<8x128xf32, #tpu.memory_space<vmem>>, vector<8x128xf32>
      %cst_25 = arith.constant dense<0xFF800000> : vector<8xf32>
      %39 = vector.multi_reduction <maximumf>, %38, %cst_25 [1] : vector<8x128xf32> to vector<8xf32>
      %40 = vector.shape_cast %39 : vector<8xf32> to vector<8x1xf32>
      %c0_26 = arith.constant 0 : index
      %c0_27 = arith.constant 0 : index
      %41 = vector.load %arg8[%c0_26, %c0_27] : memref<8x128xf32, #tpu.memory_space<vmem>>, vector<8x128xf32>
      %42 = vector.broadcast %40 : vector<8x1xf32> to vector<8x128xf32>
      %43 = arith.subf %38, %42 : vector<8x128xf32>
      %44 = math.exp %43 : vector<8x128xf32>
      %45 = arith.mulf %41, %44 : vector<8x128xf32>
      %cst_28 = arith.constant dense<0.000000e+00> : vector<8xf32>
      %46 = vector.multi_reduction <add>, %45, %cst_28 [1] : vector<8x128xf32> to vector<8xf32>
      %47 = vector.shape_cast %46 : vector<8xf32> to vector<8x1xf32>
      %c0_29 = arith.constant 0 : index
      %c0_30 = arith.constant 0 : index
      %48 = vector.load %arg9[%c0_29, %c0_30] : memref<8x128xf32, #tpu.memory_space<vmem>>, vector<8x128xf32>
      %cst_31 = arith.constant dense<0.000000e+00> : vector<8xf32>
      %49 = vector.multi_reduction <add>, %48, %cst_31 [1] : vector<8x128xf32> to vector<8xf32>
      %50 = vector.shape_cast %49 : vector<8xf32> to vector<8x1xf32>
      %c0_32 = arith.constant 0 : index
      %c0_33 = arith.constant 0 : index
      %51 = vector.load %arg10[%c0_32, %c0_33] : memref<8x128xf32, #tpu.memory_space<vmem>>, vector<8x128xf32>
      %cst_34 = arith.constant dense<0.000000e+00> : vector<8xf32>
      %52 = vector.multi_reduction <add>, %51, %cst_34 [1] : vector<8x128xf32> to vector<8xf32>
      %53 = vector.shape_cast %52 : vector<8xf32> to vector<8x1xf32>
      %cst_35 = arith.constant 1.000000e+00 : f32
      %54 = vector.broadcast %cst_35 : f32 to vector<8x1xf32>
      %55 = arith.maximumf %53, %54 : vector<8x1xf32>
      %56 = arith.divf %50, %55 : vector<8x1xf32>
      %57 = arith.subf %56, %40 : vector<8x1xf32>
      %58 = math.log %47 : vector<8x1xf32>
      %59 = arith.subf %57, %58 : vector<8x1xf32>
      %c8_i32_36 = arith.constant 8 : i32
      %60 = arith.muli %arg0, %c8_i32_36 : i32
      %61 = tpu.iota {dimensions = array<i32: 0>} : vector<8x1xi32>
      %62 = vector.broadcast %60 : i32 to vector<8x1xi32>
      %63 = arith.addi %62, %61 : vector<8x1xi32>
      %c8_i32_37 = arith.constant 8 : i32
      %64 = vector.broadcast %c8_i32_37 : i32 to vector<8x1xi32>
      %65 = arith.cmpi slt, %63, %64 : vector<8x1xi32>
      %cst_38 = arith.constant 0.000000e+00 : f32
      %66 = vector.broadcast %cst_38 : f32 to vector<8x1xf32>
      %67 = arith.cmpf ogt, %53, %66 : vector<8x1xf32>
      %68 = arith.andi %65, %67 : vector<8x1xi1>
      %cst_39 = arith.constant -1.000000e+00 : f32
      %69 = vector.broadcast %cst_39 : f32 to vector<8x1xf32>
      %70 = arith.mulf %69, %59 : vector<8x1xf32>
      %cst_40 = arith.constant 0.000000e+00 : f32
      %71 = vector.broadcast %cst_40 : f32 to vector<8x1xf32>
      %72 = arith.select %68, %70, %71 : vector<8x1xi1>, vector<8x1xf32>
      %c0_41 = arith.constant 0 : index
      %c0_42 = arith.constant 0 : index
      %73 = vector.load %arg6[%c0_41, %c0_42] : memref<8x1xf32, #tpu.memory_space<vmem>>, vector<8x1xf32>
      tpu.vector_store %arg6[%c0_41, %c0_42], %72 {strides = array<i32>} : memref<8x1xf32, #tpu.memory_space<vmem>>, vector<8x1xf32>,
    } else {
    }
    return
  }
  func.func @transform_0(%arg0: i32, %arg1: i32) -> (i32, i32) {
    %c0_i32 = arith.constant 0 : i32
    %c0_i32_0 = arith.constant 0 : i32
    return %arg0, %c0_i32 : i32, i32
  }
  func.func @transform_1(%arg0: i32, %arg1: i32) -> (i32, i32) {
    %c0_i32 = arith.constant 0 : i32
    %c0_i32_0 = arith.constant 0 : i32
    return %arg1, %c0_i32 : i32, i32
  }
  func.func @transform_2(%arg0: i32, %arg1: i32) -> (i32, i32) {
    %c0_i32 = arith.constant 0 : i32
    %c0_i32_0 = arith.constant 0 : i32
    return %arg0, %c0_i32 : i32, i32
  }
  func.func @transform_3(%arg0: i32, %arg1: i32) -> (i32, i32) {
    %c0_i32 = arith.constant 0 : i32
    %c0_i32_0 = arith.constant 0 : i32
    return %c0_i32, %arg1 : i32, i32
  }
  func.func @transform_4(%arg0: i32, %arg1: i32) -> (i32, i32) {
    %c0_i32 = arith.constant 0 : i32
    %c0_i32_0 = arith.constant 0 : i32
    return %arg0, %c0_i32 : i32, i32
  }
}

</mosaic_0001>

<llo_original>
// kernel: tpu_custom_call.1
$region0: #{tpu_custom_call.1}
  #allocation0 [shape = 'u32[]', space=smem, size = 0x4, offset = 0x4, fixed_abs, tag = 'smem constant byte address 0x4 - core index']
  #allocation1 [shape = 'u32[144,128]{1,0:T(1,128)}', space=vmem, size = 0x12000, scoped, tag = 'internal scratch']
  #allocation2 [shape = 'f32[8,128]{1,0:T(8,128)}', space=vmem, size = 0x1000, scoped, tag = 'scratch operand']
  #allocation3 [shape = 'f32[8,128]{1,0:T(8,128)}', space=vmem, size = 0x1000, scoped, tag = 'scratch operand']
  #allocation4 [shape = 'f32[8,128]{1,0:T(8,128)}', space=vmem, size = 0x1000, scoped, tag = 'scratch operand']
  #allocation5 [shape = 'f32[8,128]{1,0:T(8,128)}', space=vmem, size = 0x1000, scoped, tag = 'scratch operand']
  %s0 = inlined_call_operand.vmem [shape: f32[8,32], index: 0, kind: input, shape index: {}]
  %s1 = inlined_call_operand.vmem [shape: f32[128,32], index: 1, kind: input, shape index: {}]
  %s2 = inlined_call_operand.vmem [shape: s32[8,1], index: 2, kind: input, shape index: {}]
  %s3 = inlined_call_operand.vmem [shape: s32[1,128], index: 3, kind: input, shape index: {}]
  %s4 = inlined_call_operand.vmem [shape: f32[8,1], index: 4, kind: output, shape index: {}]
  %s5 = sld [smem:[#allocation0]]
  $region42: #{tpu_custom_call.1} parent=0
    _
  %s7 = ssub.s32 1, %s5
  %s8 = scalar_select 0, %s7, %s5
  // Predicated region
  $region2: #{tpu_custom_call.1} parent=0 // pred_check
    _
  $region3: #{tpu_custom_call.1} parent=0 // pred_check_branch
    %10 = sbr.rel (0) target = $region5
  $region4: #{tpu_custom_call.1} parent=0 // pred_region
    _
  $region5: #{tpu_custom_call.1} parent=0 // pred_fallthru
    _
  // Predicated region
  $region6: #{tpu_custom_call.1} parent=0 // pred_check
    _
  $region7: #{tpu_custom_call.1} parent=0 // pred_check_branch
    %12 = sbr.rel (0) target = $region9
  $region8: #{tpu_custom_call.1} parent=0 // pred_region
    _
  $region9: #{tpu_custom_call.1} parent=0 // pred_fallthru
    _
  // Predicated region
  $region10: #{tpu_custom_call.1} parent=0 // pred_check
    _
  $region11: #{tpu_custom_call.1} parent=0 // pred_check_branch
    %14 = sbr.rel (0) target = $region13
  $region12: #{tpu_custom_call.1} parent=0 // pred_region
    _
  $region13: #{tpu_custom_call.1} parent=0 // pred_fallthru
    _
  // Predicated region
  $region14: #{tpu_custom_call.1} parent=0 // pred_check
    _
  $region15: #{tpu_custom_call.1} parent=0 // pred_check_branch
    %16 = sbr.rel (0) target = $region17
  $region16: #{tpu_custom_call.1} parent=0 // pred_region
    _
  $region17: #{tpu_custom_call.1} parent=0 // pred_fallthru
    _
  %p17 = scmp.eq.s32.totalorder 0, 0
  // Predicated region
  $region18: #{tpu_custom_call.1} parent=0 // pred_check
    %p18 = pneg %p17
  $region19: #{tpu_custom_call.1} parent=0 // pred_check_branch
    %20 = sbr.rel (%p18) target = $region21
  $region20: #{tpu_custom_call.1} parent=0 // pred_region
    %21 = vst [vmem:[#allocation2] sm:$0xff] -inf
    %22 = vst [vmem:[#allocation3] sm:$0xff] 0.0
    %23 = vst [vmem:[#allocation4] sm:$0xff] 0.0
    %24 = vst [vmem:[#allocation5] sm:$0xff] 0.0
  $region21: #{tpu_custom_call.1} parent=0 // pred_fallthru
    _
  %v25 = vld [vmem:[%s0] sm:$0xff]
  %v26 = vld [vmem:[%s1] sm:$0xff]
  %v27 = vld [vmem:[%s1 + $0x8] sm:$0xff]
  %v28 = vld [vmem:[%s1 + $0x10] sm:$0xff]
  %v29 = vld [vmem:[%s1 + $0x18] sm:$0xff]
  %v30 = vld [vmem:[%s1 + $0x20] sm:$0xff]
  %v31 = vld [vmem:[%s1 + $0x28] sm:$0xff]
  %v32 = vld [vmem:[%s1 + $0x30] sm:$0xff]
  %v33 = vld [vmem:[%s1 + $0x38] sm:$0xff]
  %v34 = vld [vmem:[%s1 + $0x40] sm:$0xff]
  %v35 = vld [vmem:[%s1 + $0x48] sm:$0xff]
  %v36 = vld [vmem:[%s1 + $0x50] sm:$0xff]
  %v37 = vld [vmem:[%s1 + $0x58] sm:$0xff]
  %v38 = vld [vmem:[%s1 + $0x60] sm:$0xff]
  %v39 = vld [vmem:[%s1 + $0x68] sm:$0xff]
  %v40 = vld [vmem:[%s1 + $0x70] sm:$0xff]
  %v41 = vld [vmem:[%s1 + $0x78] sm:$0xff]
  %vm42 = vcmask 261120
  %v44 = vsel %vm42, %v25, 0
  %v47 = vsel %vm42, %v26, 0
  %v50 = vsel %vm42, %v27, 0
  %v53 = vsel %vm42, %v28, 0
  %v56 = vsel %vm42, %v29, 0
  %v59 = vsel %vm42, %v30, 0
  %v62 = vsel %vm42, %v31, 0
  %v65 = vsel %vm42, %v32, 0
  %v68 = vsel %vm42, %v33, 0
  %v71 = vsel %vm42, %v34, 0
  %v74 = vsel %vm42, %v35, 0
  %v77 = vsel %vm42, %v36, 0
  %v80 = vsel %vm42, %v37, 0
  %v83 = vsel %vm42, %v38, 0
  %v86 = vsel %vm42, %v39, 0
  %v89 = vsel %vm42, %v40, 0
  %v92 = vsel %vm42, %v41, 0
  %94 = vmatprep.subr.mxu0 0.0
  %95 = vmatpush1.xpose.msra.mxu0 %v47
  %96 = vmatprep.subr.mxu0 0.0
  %97 = vmatpush1.xpose.msra.mxu0 %v50
  %98 = vmatprep.subr.mxu0 0.0
  %99 = vmatpush1.xpose.msra.mxu0 %v53
  %100 = vmatprep.subr.mxu0 0.0
  %101 = vmatpush1.xpose.msra.mxu0 %v56
  %102 = vmatprep.subr.mxu0 0.0
  %103 = vmatpush1.xpose.msra.mxu0 %v59
  %104 = vmatprep.subr.mxu0 0.0
  %105 = vmatpush1.xpose.msra.mxu0 %v62
  %106 = vmatprep.subr.mxu0 0.0
  %107 = vmatpush1.xpose.msra.mxu0 %v65
  %108 = vmatprep.subr.mxu0 0.0
  %109 = vmatpush1.xpose.msra.mxu0 %v68
  %110 = vmatprep.subr.mxu0 0.0
  %111 = vmatpush1.xpose.msra.mxu0 %v71
  %112 = vmatprep.subr.mxu0 0.0
  %113 = vmatpush1.xpose.msra.mxu0 %v74
  %114 = vmatprep.subr.mxu0 0.0
  %115 = vmatpush1.xpose.msra.mxu0 %v77
  %116 = vmatprep.subr.mxu0 0.0
  %117 = vmatpush1.xpose.msra.mxu0 %v80
  %118 = vmatprep.subr.mxu0 0.0
  %119 = vmatpush1.xpose.msra.mxu0 %v83
  %120 = vmatprep.subr.mxu0 0.0
  %121 = vmatpush1.xpose.msra.mxu0 %v86
  %122 = vmatprep.subr.mxu0 0.0
  %123 = vmatpush1.xpose.msra.mxu0 %v89
  %124 = vmatprep.subr.mxu0 0.0
  %125 = vmatpush1.xpose.msra.mxu0 %v92
  %126 = vmatprep.subr.mxu0 0.0
  %127 = vmatpush1.xpose.msra.mxu0 0.0
  %128 = vmatprep.subr.mxu0 0.0
  %129 = vmatpush1.xpose.msra.mxu0 0.0
  %130 = vmatprep.subr.mxu0 0.0
  %131 = vmatpush1.xpose.msra.mxu0 0.0
  %132 = vmatprep.subr.mxu0 0.0
  %133 = vmatpush1.xpose.msra.mxu0 0.0
  %134 = vmatprep.subr.mxu0 0.0
  %135 = vmatpush1.xpose.msra.mxu0 0.0
  %136 = vmatprep.subr.mxu0 0.0
  %137 = vmatpush1.xpose.msra.mxu0 0.0
  %138 = vmatprep.subr.mxu0 0.0
  %139 = vmatpush1.xpose.msra.mxu0 0.0
  %140 = vmatprep.subr.mxu0 0.0
  %141 = vmatpush1.xpose.msra.mxu0 0.0
  %142 = vmatprep.subr.mxu0 0.0
  %143 = vmatpush1.xpose.msra.mxu0 0.0
  %144 = vmatprep.subr.mxu0 0.0
  %145 = vmatpush1.xpose.msra.mxu0 0.0
  %146 = vmatprep.subr.mxu0 0.0
  %147 = vmatpush1.xpose.msra.mxu0 0.0
  %148 = vmatprep.subr.mxu0 0.0
  %149 = vmatpush1.xpose.msra.mxu0 0.0
  %150 = vmatprep.subr.mxu0 0.0
  %151 = vmatpush1.xpose.msra.mxu0 0.0
  %152 = vmatprep.subr.mxu0 0.0
  %153 = vmatpush1.xpose.msra.mxu0 0.0
  %154 = vmatprep.subr.mxu0 0.0
  %155 = vmatpush1.xpose.msra.mxu0 0.0
  %156 = vmatprep.subr.mxu0 0.0
  %157 = vmatpush1.xpose.msra.mxu0 0.0
  %158 = vmatprep.mubr.f32.mxu0 0.0
  %159 = vmatmul.mubr.f32.gmra.mrb[0].mxu0 %v44
  %v160 = vpop.f32.mrb[0].mxu0
  %v161 = vadd.f32 0.0, %v160
  %v162 = vpop.f32.mrb[0].mxu0
  %163 = vdwg.mxu0
  %v164 = vmul.f32 %v161, 14.285714
  %v165 = vld [vmem:[#allocation2] sm:$0xff]
  %v166 = vmax.f32 %v165, %v164
  %167 = vst [vmem:[#allocation2] sm:$0xff] %v166
  %v168 = vld [vmem:[#allocation3] sm:$0xff]
  %v169 = vsub.f32 %v165, %v166
  %v170 = vmul.f32 %v169, 1.442695
  %v171 = vpow.pop %v170
  %v172 = vmul.f32 %v168, %v171
  %173 = vst [vmem:[#allocation3] sm:$0xff] %v172
  %v174 = vld [vmem:[%s2] sm:$0xff]
  %175 = vset.pattern.permute.xlu0 0
  %176 = vperm.xlu0 %175, %v174
  %v177 = vpop.permute.xlu0 %176
  %s178 = smul.u32 0, 8
  %s179 = sadd.s32 0, 1
  %s180 = smul.u32 %s179, 128
  %p181 = scmp.lt.s32.totalorder %s178, %s180
  %s182 = smul.u32 0, 128
  %s183 = sadd.s32 0, 1
  %s184 = smul.u32 %s183, 8
  %p185 = scmp.lt.s32.totalorder %s182, %s184
  %p186 = pnand %p181, %p185
  %p187 = pneg %p186
  %p188 = por %p187, %p17
  // Predicated region
  $region22: #{tpu_custom_call.1} parent=0 // pred_check
    %p189 = pneg %p188
  $region23: #{tpu_custom_call.1} parent=0 // pred_check_branch
    %191 = sbr.rel (%p189) target = $region25
  $region24: #{tpu_custom_call.1} parent=0 // pred_region
    %v192 = vld [vmem:[#allocation3] sm:$0xff]
    %v193 = vld [vmem:[#allocation4] sm:$0xff]
    %v194 = vld [vmem:[#allocation5] sm:$0xff]
    %v195 = vlaneseq
    %v196 = vshrl.u32 %v195, 7
    %v197 = vstv %s178
    %v198 = vadd.s32 %v197, %v196
    %v199 = vlaneseq
    %v200 = vand.u32 %v199, 127
    %v201 = vld [vmem:[%s3] sm:$0x1]
    %v202 = vlaneseq
    %v203 = vshrl.u32 %v202, 7
    %v204 = vsub.s32 0, %v203
    %v205 = vrot.slane %v201, %v204
    %vm206 = vcmp.eq.s32.totalorder %v177, %v205
    %v207 = vstv %s182
    %v208 = vadd.s32 %v207, %v200
    %vm209 = vcmp.ne.s32.totalorder %v198, %v208
    %vm210 = vcmp.lt.s32.totalorder %v208, 8
    %vm211 = vmand %vm209, %vm210
    %vm212 = vmand %vm206, %vm211
    %v213 = vsub.f32 %v164, %v166
    %v214 = vmul.f32 %v213, 1.442695
    %v215 = vpow.pop %v214
    %v216 = vsel %vm211, %v215, 0.0
    %v217 = vadd.f32 %v192, %v216
    %v218 = vsel %vm212, %v164, 0.0
    %v219 = vadd.f32 %v193, %v218
    %v220 = vsel %vm212, 1, 0
    %v221 = vcvt.s32.f32 %v220
    %v222 = vadd.f32 %v194, %v221
    %223 = vst [vmem:[#allocation3] sm:$0xff] %v217
    %224 = vst [vmem:[#allocation4] sm:$0xff] %v219
    %225 = vst [vmem:[#allocation5] sm:$0xff] %v222
  $region25: #{tpu_custom_call.1} parent=0 // pred_fallthru
    _
  %p226 = pneg %p188
  // Predicated region
  $region26: #{tpu_custom_call.1} parent=0 // pred_check
    _
  $region27: #{tpu_custom_call.1} parent=0 // pred_check_branch
    %228 = sbr.rel (%p188) target = $region29
  $region28: #{tpu_custom_call.1} parent=0 // pred_region
    %v229 = vld [vmem:[#allocation3] sm:$0xff]
    %v230 = vld [vmem:[#allocation4] sm:$0xff]
    %v231 = vld [vmem:[#allocation5] sm:$0xff]
    %v232 = vld [vmem:[%s3] sm:$0x1]
    %v233 = vlaneseq
    %v234 = vshrl.u32 %v233, 7
    %v235 = vsub.s32 0, %v234
    %v236 = vrot.slane %v232, %v235
    %vm237 = vcmp.eq.s32.totalorder %v177, %v236
    %v238 = vsub.f32 %v164, %v166
    %v239 = vmul.f32 %v238, 1.442695
    %v240 = vpow.pop %v239
    %v241 = vadd.f32 %v229, %v240
    %v242 = vsel %vm237, %v164, 0.0
    %v243 = vadd.f32 %v230, %v242
    %v244 = vsel %vm237, 1, 0
    %v245 = vcvt.s32.f32 %v244
    %v246 = vadd.f32 %v231, %v245
    %247 = vst [vmem:[#allocation3] sm:$0xff] %v241
    %248 = vst [vmem:[#allocation4] sm:$0xff] %v243
    %249 = vst [vmem:[#allocation5] sm:$0xff] %v246
  $region29: #{tpu_custom_call.1} parent=0 // pred_fallthru
    _
  // Predicated region
  $region30: #{tpu_custom_call.1} parent=0 // pred_check
    %p250 = pneg %p17
  $region31: #{tpu_custom_call.1} parent=0 // pred_check_branch
    %252 = sbr.rel (%p250) target = $region33
  $region32: #{tpu_custom_call.1} parent=0 // pred_region
    %v253 = vld [vmem:[#allocation2] sm:$0xff]
    %254 = vmax.xlane.f32.xlu0 %v253
    %v255 = vpop.xlane.xlu0 %254
    %v256 = vld [vmem:[#allocation3] sm:$0xff]
    %v257 = vsub.f32 %v253, %v255
    %v258 = vmul.f32 %v257, 1.442695
    %v259 = vpow.pop %v258
    %v260 = vmul.f32 %v256, %v259
    %261 = vadd.xlane.f32.xlu0 %v260
    %v262 = vpop.xlane.xlu0 %261
    %v263 = vld [vmem:[#allocation4] sm:$0xff]
    %264 = vadd.xlane.f32.xlu0 %v263
    %v265 = vpop.xlane.xlu0 %264
    %v266 = vld [vmem:[#allocation5] sm:$0xff]
    %267 = vadd.xlane.f32.xlu0 %v266
    %v268 = vpop.xlane.xlu0 %267
    %v269 = vmax.f32 %v268, 1.0
    %v270 = vrcp.pop %v269
    %v271 = vmul.f32 %v265, %v270
    %v272 = vsub.f32 %v271, %v255
    %v273 = vlog2.pop %v262
    %v274 = vmul.f32 %v273, 0.6931472
    %v275 = vsub.f32 %v272, %v274
    %v276 = vlaneseq
    %v277 = vshrl.u32 %v276, 7
    %v278 = vstv %s178
    %v279 = vadd.s32 %v278, %v277
    %vm280 = vcmp.lt.s32.totalorder %v279, 8
    %vm281 = vcmp.gt.f32.partialorder %v268, 0.0
    %vm282 = vmand %vm280, %vm281
    %v283 = vmul.f32 %v275, -1.0
    %v284 = vsel %vm282, %v283, 0.0
    %vm285 = vcmask 7168
    %286 = vst.msk [vmem:[%s4] sm:$0xff] %vm285, %v284
  $region33: #{tpu_custom_call.1} parent=0 // pred_fallthru
    _
  // Predicated region
  $region34: #{tpu_custom_call.1} parent=0 // pred_check
    _
  $region35: #{tpu_custom_call.1} parent=0 // pred_check_branch
    %288 = sbr.rel (0) target = $region37
  $region36: #{tpu_custom_call.1} parent=0 // pred_region
    _
  $region37: #{tpu_custom_call.1} parent=0 // pred_fallthru
    _
  // Predicated region
  $region38: #{tpu_custom_call.1} parent=0 // pred_check
    _
  $region39: #{tpu_custom_call.1} parent=0 // pred_check_branch
    %290 = sbr.rel (0) target = $region41
  $region40: #{tpu_custom_call.1} parent=0 // pred_region
    _
  $region41: #{tpu_custom_call.1} parent=0 // pred_fallthru
    _

</llo_original>
